<compile_context>
chip_gen: v6e
topology: v6e:2x2x1
jax: 0.10.0
libtpu: 0.0.40
codegen_flags: <defaults>
</compile_context>

<pallas_src>
import math
import functools

import numpy as np
import jax
import jax.numpy as jnp
from jax.experimental import pallas as pl
from jax.experimental.pallas import tpu as pltpu


# -----------------------------------------------------------------------------
# host-side IoU helpers (same math as the reference bbox_iou / bbox_ious)
# -----------------------------------------------------------------------------
def bbox_iou_np(box1, box2):
    # boxes are (cx, cy, w, h)
    mx = min(box1[0] - box1[2] / 2.0, box2[0] - box2[2] / 2.0)
    Mx = max(box1[0] + box1[2] / 2.0, box2[0] + box2[2] / 2.0)
    my = min(box1[1] - box1[3] / 2.0, box2[1] - box2[3] / 2.0)
    My = max(box1[1] + box1[3] / 2.0, box2[1] + box2[3] / 2.0)
    w1, h1, w2, h2 = box1[2], box1[3], box2[2], box2[3]
    uw = Mx - mx
    uh = My - my
    cw = w1 + w2 - uw
    ch = h1 + h2 - uh
    if cw <= 0 or ch <= 0:
        return 0.0
    area1 = w1 * h1
    area2 = w2 * h2
    carea = cw * ch
    uarea = area1 + area2 - carea
    return float(carea / uarea)


def bbox_ious_np(boxes1, boxes2):
    # boxes: (4, N) in (cx, cy, w, h)
    mx = np.minimum(boxes1[0] - boxes1[2] / 2.0, boxes2[0] - boxes2[2] / 2.0)
    Mx = np.maximum(boxes1[0] + boxes1[2] / 2.0, boxes2[0] + boxes2[2] / 2.0)
    my = np.minimum(boxes1[1] - boxes1[3] / 2.0, boxes2[1] - boxes2[3] / 2.0)
    My = np.maximum(boxes1[1] + boxes1[3] / 2.0, boxes2[1] + boxes2[3] / 2.0)
    w1, h1 = boxes1[2], boxes1[3]
    w2, h2 = boxes2[2], boxes2[3]
    uw = Mx - mx
    uh = My - my
    cw = w1 + w2 - uw
    ch = h1 + h2 - uh
    bad = (cw <= 0) | (ch <= 0)
    area1 = w1 * h1
    area2 = w2 * h2
    carea = np.where(bad, 0.0, cw * ch)
    uarea = area1 + area2 - carea
    return carea / uarea


# -----------------------------------------------------------------------------
# host-side build_targets_Ava (sequential / data-dependent; mirrors reference)
# -----------------------------------------------------------------------------
def build_targets_ava_np(pred_boxes, target_cls, target_boxes, anchors, num_anchors,
                         num_classes, nH, nW, noobject_scale, object_scale, sil_thresh):
    nB = target_cls.shape[0]
    nA = num_anchors
    nC = num_classes
    anchor_step = len(anchors) // num_anchors
    conf_mask = np.ones((nB, nA, nH, nW), np.float32) * noobject_scale
    coord_mask = np.zeros((nB, nA, nH, nW), np.float32)
    cls_mask = np.zeros((nB, nA, nH, nW), np.float32)
    tx = np.zeros((nB, nA, nH, nW), np.float32)
    ty = np.zeros((nB, nA, nH, nW), np.float32)
    tw = np.zeros((nB, nA, nH, nW), np.float32)
    th = np.zeros((nB, nA, nH, nW), np.float32)
    tconf = np.zeros((nB, nA, nH, nW), np.float32)
    tcls = np.zeros((nB, nA, nH, nW, nC), np.float32)
    nAnchors = nA * nH * nW
    nPixels = nH * nW

    for b in range(nB):
        cur_pred_boxes = pred_boxes[b * nAnchors:(b + 1) * nAnchors].T  # (4, nAnchors)
        cur_ious = np.zeros(nAnchors, np.float32)
        for t in range(50):
            if target_boxes[b, t, 2] == 0:
                break
            gx = target_boxes[b, t, 0] * nW
            gy = target_boxes[b, t, 1] * nH
            gw = target_boxes[b, t, 2] * nW
            gh = target_boxes[b, t, 3] * nH
            cur_gt = np.tile(np.array([gx, gy, gw, gh], np.float32)[:, None], (1, nAnchors))
            cur_ious = np.maximum(cur_ious, bbox_ious_np(cur_pred_boxes, cur_gt))
        flat = conf_mask.reshape(nB, -1)
        flat[b, cur_ious > sil_thresh] = 0

    nGT = 0
    nCorrect = 0
    for b in range(nB):
        for t in range(50):
            if target_boxes[b, t, 2] == 0:
                break
            nGT += 1
            best_iou = 0.0
            best_n = -1
            gx = target_boxes[b, t, 0] * nW
            gy = target_boxes[b, t, 1] * nH
            gi = int(gx)
            gj = int(gy)
            gw = target_boxes[b, t, 2] * nW
            gh = target_boxes[b, t, 3] * nH
            gt_box = [0, 0, gw, gh]
            for n in range(nA):
                aw = anchors[anchor_step * n]
                ah = anchors[anchor_step * n + 1]
                iou = bbox_iou_np([0, 0, aw, ah], gt_box)
                if iou > best_iou:
                    best_iou = iou
                    best_n = n
            gt_box = [gx, gy, gw, gh]
            pred_box = pred_boxes[b * nAnchors + best_n * nPixels + gj * nW + gi]
            coord_mask[b, best_n, gj, gi] = 1
            cls_mask[b, best_n, gj, gi] = 1
            conf_mask[b, best_n, gj, gi] = object_scale
            tx[b, best_n, gj, gi] = target_boxes[b, t, 0] * nW - gi
            ty[b, best_n, gj, gi] = target_boxes[b, t, 1] * nH - gj
            tw[b, best_n, gj, gi] = math.log(gw / anchors[anchor_step * best_n])
            th[b, best_n, gj, gi] = math.log(gh / anchors[anchor_step * best_n + 1])
            iou = bbox_iou_np(gt_box, pred_box)
            tconf[b, best_n, gj, gi] = iou
            tcls[b, best_n, gj, gi, :] = target_cls[b, t, :]
            if iou > 0.5:
                nCorrect += 1
    return nGT, nCorrect, coord_mask, conf_mask, cls_mask, tx, ty, tw, th, tconf, tcls


# -----------------------------------------------------------------------------
# Pallas kernel 1: decode.  Flattened lane-dense head (5, R, 128); grid/anchor
# values generated in-kernel; emits ONLY pred-box planes + nProposals scalar.
# -----------------------------------------------------------------------------
def _decode_kernel(head_ref, anc_ref, pb_ref, nprop_ref, *, nA, nW, nHW, n_valid):
    shape = head_ref[0].shape                       # (R, 128)
    lanes = shape[1]
    row = jax.lax.broadcasted_iota(jnp.int32, shape, 0)
    col = jax.lax.broadcasted_iota(jnp.int32, shape, 1)
    flat_i = row * lanes + col                      # flattened (b,a,h,w) index
    valid = flat_i < n_valid                        # masks the lane-padding tail
    flat = flat_i.astype(jnp.float32)

    # index math in f32: all values << 2^23 so they are exactly representable;
    # the +0.5 nudge keeps floor() exact even with approximately-rounded f32 div.
    ba = jnp.floor((flat + 0.5) / float(nHW))       # b*nA + a
    pix = flat - ba * float(nHW)                    # h*nW + w
    gy = jnp.floor((pix + 0.5) / float(nW))
    gx = pix - gy * float(nW)
    a_idx = ba - jnp.floor((ba + 0.5) / float(nA)) * float(nA)

    aw = jnp.zeros(shape, jnp.float32)
    ah = jnp.zeros(shape, jnp.float32)
    for n in range(nA):                             # tiny unrolled anchor select
        sel = a_idx == float(n)
        aw = jnp.where(sel, anc_ref[2 * n], aw)
        ah = jnp.where(sel, anc_ref[2 * n + 1], ah)

    def sig(v):                                     # 1 EUP push (tanh) per sigmoid
        return 0.5 * jnp.tanh(0.5 * v) + 0.5

    x = sig(head_ref[0])
    y = sig(head_ref[1])
    conf = sig(head_ref[4])

    pb_ref[0] = x + gx
    pb_ref[1] = y + gy
    pb_ref[2] = jnp.exp(head_ref[2]) * aw
    pb_ref[3] = jnp.exp(head_ref[3]) * ah

    nprop_ref[0] = jnp.sum(
        jnp.where(jnp.logical_and(valid, conf > 0.25), 1.0, 0.0))


def decode_call(head, anc_wh, *, nA, nW, nHW, n_valid):
    C, R, L = head.shape
    assert C == 5 and L == 128
    vmem = pl.BlockSpec(memory_space=pltpu.MemorySpace.VMEM)
    smem = pl.BlockSpec(memory_space=pltpu.MemorySpace.SMEM)
    kern = functools.partial(_decode_kernel, nA=int(nA), nW=int(nW),
                             nHW=int(nHW), n_valid=int(n_valid))
    return pl.pallas_call(
        kern,
        out_shape=(
            jax.ShapeDtypeStruct((4, R, L), jnp.float32),   # pred boxes, flat layout
            jax.ShapeDtypeStruct((1,), jnp.float32),        # nProposals
        ),
        in_specs=[vmem, smem],
        out_specs=(vmem, smem),
    )(head, anc_wh)


# -----------------------------------------------------------------------------
# Pallas kernel 2 (fused): masked SmoothL1 (x,y,w,h) + masked MSE (conf) over
# the flattened slab + row-gathered binary focal class loss.  Sigmoids are
# recomputed from the head (no dec HBM round trip).  Scalars land in SMEM.
# -----------------------------------------------------------------------------
def _loss_kernel(head_ref, aux_ref, cls_ref, tcls_ref, weff_ref, o_ref,
                 *, coord_scale, gamma, n_pose):
    def sig(v):
        return 0.5 * jnp.tanh(0.5 * v) + 0.5

    cm = aux_ref[5]                                  # coord mask (0/1), zero in padding

    # ---- coord losses: SmoothL1 on masked diffs (equivalent to SmoothL1(x*m, t*m))
    preds = (sig(head_ref[0]), sig(head_ref[1]), head_ref[2], head_ref[3])
    for i in range(4):
        d = (preds[i] - aux_ref[i]) * cm
        ad = jnp.abs(d)
        sl1 = jnp.where(ad < 1.0, 0.5 * d * d, ad - 0.5)
        o_ref[i] = coord_scale * jnp.sum(sl1) / 2.0

    # ---- conf loss: sum(conf_mask * (conf - tconf)^2) / 2  (== MSE with sqrt mask)
    dc = sig(head_ref[4]) - aux_ref[4]
    o_ref[4] = jnp.sum(aux_ref[6] * dc * dc) / 2.0

    # ---- class focal loss on the gathered (padded) rows only
    logits = cls_ref[...]                            # (Rg, nC) raw class logits
    tcls = tcls_ref[...]                             # (Rg, nC) multi-hot targets
    weff = weff_ref[...]                             # (Rg, nC) precomputed weights
    Rg, nC = logits.shape

    colc = jax.lax.broadcasted_iota(jnp.int32, (Rg, nC), 1)
    pose = colc < n_pose                             # softmax over first n_pose cols

    zp = jnp.where(pose, logits, jnp.float32(-1e30))
    m = jnp.max(zp, axis=-1, keepdims=True)
    e = jnp.where(pose, jnp.exp(zp - m), 0.0)
    s = jnp.sum(e, axis=-1, keepdims=True)
    p_pose = e / s
    p_sig = sig(logits)
    p = jnp.clip(jnp.where(pose, p_pose, p_sig), 0.0001, 1.0 - 0.0001)

    is_one = tcls > 0.5
    p_t = jnp.where(is_one, p, 1.0 - p)
    if gamma == 0.5:
        mod = jnp.sqrt(1.0 - p_t)                    # pow(x, 0.5) == sqrt(x)
    else:
        mod = jnp.exp(gamma * jnp.log(jnp.maximum(1.0 - p_t, 1e-12)))
    o_ref[5] = -jnp.sum(mod * jnp.log(p_t) * weff)   # weff already folds row mask


def loss_call(head, aux, cls_sel, tcls_sel, weff, *, coord_scale, gamma, n_pose):
    vmem = pl.BlockSpec(memory_space=pltpu.MemorySpace.VMEM)
    smem = pl.BlockSpec(memory_space=pltpu.MemorySpace.SMEM)
    kern = functools.partial(_loss_kernel, coord_scale=float(coord_scale),
                             gamma=float(gamma), n_pose=int(n_pose))
    return pl.pallas_call(
        kern,
        out_shape=jax.ShapeDtypeStruct((6,), jnp.float32),
        in_specs=[vmem] * 5,
        out_specs=smem,
    )(head, aux, cls_sel, tcls_sel, weff)


# -----------------------------------------------------------------------------
# RegionLoss_Ava forward (JAX/Pallas)
# -----------------------------------------------------------------------------
class RegionLossAvaPallas:
    def __init__(self, num_classes, anchors, num_anchors,
                 object_scale, noobject_scale, class_scale, coord_scale,
                 class_weight):
        self.num_classes = num_classes
        self.anchors = [float(a) for a in anchors]
        self.num_anchors = num_anchors
        self.anchor_step = len(self.anchors) // num_anchors
        self.object_scale = object_scale
        self.noobject_scale = noobject_scale
        self.class_scale = class_scale
        self.coord_scale = coord_scale
        self.thresh = 0.6
        self.gamma = 0.5                  # binary_FocalLoss gamma
        self.n_pose = 14                  # softmax over first 14 classes
        cw = np.asarray(class_weight, np.float32)
        self.w_pos = np.exp(cw)           # hoisted exp(class_weight)     (targets==1)
        self.w_neg = np.exp(1.0 - cw)     # hoisted exp(1 - class_weight) (targets==0)
        anc = np.asarray(self.anchors, np.float32).reshape(num_anchors, self.anchor_step)
        self.anc_wh = np.ascontiguousarray(anc[:, :2]).reshape(-1)  # [w0,h0,w1,h1,...]

    def __call__(self, output, target_cls, target_boxes):
        nB = output.shape[0]
        nA = self.num_anchors
        nC = self.num_classes
        nH, nW = int(output.shape[2]), int(output.shape[3])
        nHW = nH * nW
        nBA = nB * nA
        N = nBA * nHW                                # flattened element count
        Npad = ((N + 127) // 128) * 128              # lane-dense padded size
        R = Npad // 128

        out_r = jnp.reshape(output.astype(jnp.float32), (nBA, 5 + nC, nHW))

        # channel-leading, flattened, lane-dense head slab (tiny wrapper relayout)
        head = jnp.transpose(out_r[:, :5, :], (1, 0, 2)).reshape(5, N)
        head = jnp.pad(head, ((0, 0), (0, Npad - N))).reshape(5, R, 128)

        # Kernel 1: decode -> pred boxes (4, R, 128) + nProposals
        pb, nprop = decode_call(head, jnp.asarray(self.anc_wh),
                                nA=nA, nW=nW, nHW=nHW, n_valid=N)

        # single coalesced D2H sync before the host-side target building
        pb_np, nprop_np = jax.device_get((pb, nprop))
        pred_boxes = pb_np.reshape(4, Npad)[:, :N].T                 # (N, 4)
        n_proposals = int(nprop_np[0])

        (nGT, nCorrect, coord_mask, conf_mask, cls_mask,
         tx, ty, tw, th, tconf, tcls) = build_targets_ava_np(
            pred_boxes, np.asarray(target_cls), np.asarray(target_boxes),
            self.anchors, nA, nC, nH, nW,
            self.noobject_scale, self.object_scale, self.thresh)

        # one packed auxiliary slab: tx,ty,tw,th,tconf,coord_mask,conf_mask
        # (padding columns stay zero, so they never contribute to the sums)
        aux = np.zeros((7, Npad), np.float32)
        for i, a in enumerate((tx, ty, tw, th, tconf, coord_mask, conf_mask)):
            aux[i, :N] = a.reshape(-1)
        aux = aux.reshape(7, R, 128)

        # row-gather for the class focal loss: only rows with cls_mask == 1
        sel = np.nonzero(cls_mask.reshape(-1) > 0.5)[0]
        nsel = int(sel.size)
        Rg = max(((nsel + 7) // 8) * 8, 8)
        if nsel > 0:
            ba_idx = jnp.asarray((sel // nHW).astype(np.int32))
            pix_idx = jnp.asarray((sel % nHW).astype(np.int32))
            cls_sel = out_r[ba_idx, 5:, pix_idx]                      # (nsel, nC)
            cls_sel = jnp.pad(cls_sel, ((0, Rg - nsel), (0, 0)))
        else:
            cls_sel = jnp.zeros((Rg, nC), jnp.float32)
        tcls_sel = np.zeros((Rg, nC), np.float32)
        weff = np.zeros((Rg, nC), np.float32)        # folds exp-weights + row mask
        if nsel > 0:
            t_rows = tcls.reshape(-1, nC)[sel]
            tcls_sel[:nsel] = t_rows
            weff[:nsel] = np.where(t_rows > 0.5, self.w_pos, self.w_neg)

        # Kernel 2 (fused): coord + conf + focal class loss
        losses = loss_call(head, jnp.asarray(aux), cls_sel,
                           jnp.asarray(tcls_sel), jnp.asarray(weff),
                           coord_scale=self.coord_scale, gamma=self.gamma,
                           n_pose=self.n_pose)

        loss_x, loss_y, loss_w, loss_h, loss_conf = (losses[i] for i in range(5))
        # binary_FocalLoss size_average divides by the number of gathered rows
        loss_cls = self.class_scale * losses[5] / jnp.float32(max(nsel, 1))

        loss = loss_x + loss_y + loss_w + loss_h + loss_conf + loss_cls
        stats = dict(nGT=nGT, nCorrect=nCorrect, nProposals=n_proposals,
                     loss_x=loss_x, loss_y=loss_y, loss_w=loss_w, loss_h=loss_h,
                     loss_conf=loss_conf, loss_cls=loss_cls)
        return loss, stats


# -----------------------------------------------------------------------------
if __name__ == "__main__":
    # small, deterministic configuration (AVA: 80 classes, 5 anchors, 7x7 head)
    nB, nA, nC, nH, nW = 2, 5, 80, 7, 7
    anchors = [0.70458, 1.18803, 1.26654, 2.55121, 1.59382,
               4.08321, 2.30548, 4.94180, 3.52332, 5.91979]
    # deterministic stand-in for the json class-ratio file: weight_i = 1 - ratio_i
    class_ratio = np.arange(1, nC + 1, dtype=np.float32) / 160.0
    class_weight = 1.0 - class_ratio

    loss_mod = RegionLossAvaPallas(
        num_classes=nC, anchors=anchors, num_anchors=nA,
        object_scale=5.0, noobject_scale=1.0, class_scale=1.0, coord_scale=1.0,
        class_weight=class_weight)

    key = jax.random.PRNGKey(0)
    output = 0.5 * jax.random.normal(key, (nB, nA * (5 + nC), nH, nW), dtype=jnp.float32)

    # targets: boxes (cx, cy, w, h) normalized; zero-width box terminates the list
    target_boxes = np.zeros((nB, 50, 4), np.float32)
    target_cls = np.zeros((nB, 50, nC), np.float32)
    target_boxes[0, 0] = [0.30, 0.40, 0.20, 0.30]; target_cls[0, 0, [2, 20]] = 1.0
    target_boxes[0, 1] = [0.70, 0.60, 0.35, 0.50]; target_cls[0, 1, [5, 30, 60]] = 1.0
    target_boxes[1, 0] = [0.50, 0.50, 0.40, 0.40]; target_cls[1, 0, [0, 14]] = 1.0

    loss, stats = loss_mod(output, target_cls, target_boxes)
    jax.block_until_ready(loss)
    assert np.isfinite(float(loss))
    print("KERNEL_OK")
</pallas_src>

<mosaic_0001>
module attributes {stable_mosaic.version = 11 : i64} {
  func.func @_decode_kernel(%arg0: memref<5x4x128xf32, #tpu.memory_space<vmem>>, %arg1: memref<10xf32, #tpu.memory_space<smem>>, %arg2: memref<4x4x128xf32, #tpu.memory_space<vmem>>, %arg3: memref<1xf32, #tpu.memory_space<smem>>) attributes {dimension_semantics = [], scalar_prefetch = 0 : i64, scratch_operands = 0 : i64, tpu.core_type = #tpu.core_type<tc>} {
    %0 = tpu.iota {dimensions = array<i32: 0>} : vector<4x128xi32>
    %1 = tpu.iota {dimensions = array<i32: 1>} : vector<4x128xi32>
    %c128_i32 = arith.constant 128 : i32
    %2 = vector.broadcast %c128_i32 : i32 to vector<4x128xi32>
    %3 = arith.muli %0, %2 : vector<4x128xi32>
    %4 = arith.addi %3, %1 : vector<4x128xi32>
    %c490_i32 = arith.constant 490 : i32
    %5 = vector.broadcast %c490_i32 : i32 to vector<4x128xi32>
    %6 = arith.cmpi slt, %4, %5 : vector<4x128xi32>
    %7 = arith.sitofp %4 : vector<4x128xi32> to vector<4x128xf32>
    %cst = arith.constant 5.000000e-01 : f32
    %8 = vector.broadcast %cst : f32 to vector<4x128xf32>
    %9 = arith.addf %7, %8 : vector<4x128xf32>
    %cst_0 = arith.constant 4.900000e+01 : f32
    %10 = vector.broadcast %cst_0 : f32 to vector<4x128xf32>
    %11 = arith.divf %9, %10 : vector<4x128xf32>
    %12 = math.floor %11 : vector<4x128xf32>
    %cst_1 = arith.constant 4.900000e+01 : f32
    %13 = vector.broadcast %cst_1 : f32 to vector<4x128xf32>
    %14 = arith.mulf %12, %13 : vector<4x128xf32>
    %15 = arith.subf %7, %14 : vector<4x128xf32>
    %cst_2 = arith.constant 5.000000e-01 : f32
    %16 = vector.broadcast %cst_2 : f32 to vector<4x128xf32>
    %17 = arith.addf %15, %16 : vector<4x128xf32>
    %cst_3 = arith.constant 7.000000e+00 : f32
    %18 = vector.broadcast %cst_3 : f32 to vector<4x128xf32>
    %19 = arith.divf %17, %18 : vector<4x128xf32>
    %20 = math.floor %19 : vector<4x128xf32>
    %cst_4 = arith.constant 7.000000e+00 : f32
    %21 = vector.broadcast %cst_4 : f32 to vector<4x128xf32>
    %22 = arith.mulf %20, %21 : vector<4x128xf32>
    %23 = arith.subf %15, %22 : vector<4x128xf32>
    %cst_5 = arith.constant 5.000000e-01 : f32
    %24 = vector.broadcast %cst_5 : f32 to vector<4x128xf32>
    %25 = arith.addf %12, %24 : vector<4x128xf32>
    %cst_6 = arith.constant 5.000000e+00 : f32
    %26 = vector.broadcast %cst_6 : f32 to vector<4x128xf32>
    %27 = arith.divf %25, %26 : vector<4x128xf32>
    %28 = math.floor %27 : vector<4x128xf32>
    %cst_7 = arith.constant 5.000000e+00 : f32
    %29 = vector.broadcast %cst_7 : f32 to vector<4x128xf32>
    %30 = arith.mulf %28, %29 : vector<4x128xf32>
    %31 = arith.subf %12, %30 : vector<4x128xf32>
    %cst_8 = arith.constant 0.000000e+00 : f32
    %32 = vector.broadcast %cst_8 : f32 to vector<4x128xf32>
    %cst_9 = arith.constant 0.000000e+00 : f32
    %33 = vector.broadcast %cst_9 : f32 to vector<4x128xf32>
    %cst_10 = arith.constant 0.000000e+00 : f32
    %34 = vector.broadcast %cst_10 : f32 to vector<4x128xf32>
    %35 = arith.cmpf oeq, %31, %34 : vector<4x128xf32>
    %c0 = arith.constant 0 : index
    %36 = memref.load %arg1[%c0] : memref<10xf32, #tpu.memory_space<smem>>
    %37 = vector.broadcast %36 : f32 to vector<4x128xf32>
    %38 = arith.select %35, %37, %32 : vector<4x128xi1>, vector<4x128xf32>
    %c1 = arith.constant 1 : index
    %39 = memref.load %arg1[%c1] : memref<10xf32, #tpu.memory_space<smem>>
    %40 = vector.broadcast %39 : f32 to vector<4x128xf32>
    %41 = arith.select %35, %40, %33 : vector<4x128xi1>, vector<4x128xf32>
    %cst_11 = arith.constant 1.000000e+00 : f32
    %42 = vector.broadcast %cst_11 : f32 to vector<4x128xf32>
    %43 = arith.cmpf oeq, %31, %42 : vector<4x128xf32>
    %c2 = arith.constant 2 : index
    %44 = memref.load %arg1[%c2] : memref<10xf32, #tpu.memory_space<smem>>
    %45 = vector.broadcast %44 : f32 to vector<4x128xf32>
    %46 = arith.select %43, %45, %38 : vector<4x128xi1>, vector<4x128xf32>
    %c3 = arith.constant 3 : index
    %47 = memref.load %arg1[%c3] : memref<10xf32, #tpu.memory_space<smem>>
    %48 = vector.broadcast %47 : f32 to vector<4x128xf32>
    %49 = arith.select %43, %48, %41 : vector<4x128xi1>, vector<4x128xf32>
    %cst_12 = arith.constant 2.000000e+00 : f32
    %50 = vector.broadcast %cst_12 : f32 to vector<4x128xf32>
    %51 = arith.cmpf oeq, %31, %50 : vector<4x128xf32>
    %c4 = arith.constant 4 : index
    %52 = memref.load %arg1[%c4] : memref<10xf32, #tpu.memory_space<smem>>
    %53 = vector.broadcast %52 : f32 to vector<4x128xf32>
    %54 = arith.select %51, %53, %46 : vector<4x128xi1>, vector<4x128xf32>
    %c5 = arith.constant 5 : index
    %55 = memref.load %arg1[%c5] : memref<10xf32, #tpu.memory_space<smem>>
    %56 = vector.broadcast %55 : f32 to vector<4x128xf32>
    %57 = arith.select %51, %56, %49 : vector<4x128xi1>, vector<4x128xf32>
    %cst_13 = arith.constant 3.000000e+00 : f32
    %58 = vector.broadcast %cst_13 : f32 to vector<4x128xf32>
    %59 = arith.cmpf oeq, %31, %58 : vector<4x128xf32>
    %c6 = arith.constant 6 : index
    %60 = memref.load %arg1[%c6] : memref<10xf32, #tpu.memory_space<smem>>
    %61 = vector.broadcast %60 : f32 to vector<4x128xf32>
    %62 = arith.select %59, %61, %54 : vector<4x128xi1>, vector<4x128xf32>
    %c7 = arith.constant 7 : index
    %63 = memref.load %arg1[%c7] : memref<10xf32, #tpu.memory_space<smem>>
    %64 = vector.broadcast %63 : f32 to vector<4x128xf32>
    %65 = arith.select %59, %64, %57 : vector<4x128xi1>, vector<4x128xf32>
    %cst_14 = arith.constant 4.000000e+00 : f32
    %66 = vector.broadcast %cst_14 : f32 to vector<4x128xf32>
    %67 = arith.cmpf oeq, %31, %66 : vector<4x128xf32>
    %c8 = arith.constant 8 : index
    %68 = memref.load %arg1[%c8] : memref<10xf32, #tpu.memory_space<smem>>
    %69 = vector.broadcast %68 : f32 to vector<4x128xf32>
    %70 = arith.select %67, %69, %62 : vector<4x128xi1>, vector<4x128xf32>
    %c9 = arith.constant 9 : index
    %71 = memref.load %arg1[%c9] : memref<10xf32, #tpu.memory_space<smem>>
    %72 = vector.broadcast %71 : f32 to vector<4x128xf32>
    %73 = arith.select %67, %72, %65 : vector<4x128xi1>, vector<4x128xf32>
    %c0_15 = arith.constant 0 : index
    %c0_16 = arith.constant 0 : index
    %c0_17 = arith.constant 0 : index
    %74 = vector.load %arg0[%c0_15, %c0_16, %c0_17] : memref<5x4x128xf32, #tpu.memory_space<vmem>>, vector<1x4x128xf32>
    %75 = vector.shape_cast %74 : vector<1x4x128xf32> to vector<4x128xf32>
    %cst_18 = arith.constant 5.000000e-01 : f32
    %76 = vector.broadcast %cst_18 : f32 to vector<4x128xf32>
    %77 = arith.mulf %76, %75 : vector<4x128xf32>
    %78 = math.tanh %77 : vector<4x128xf32>
    %cst_19 = arith.constant 5.000000e-01 : f32
    %79 = vector.broadcast %cst_19 : f32 to vector<4x128xf32>
    %80 = arith.mulf %79, %78 : vector<4x128xf32>
    %cst_20 = arith.constant 5.000000e-01 : f32
    %81 = vector.broadcast %cst_20 : f32 to vector<4x128xf32>
    %82 = arith.addf %80, %81 : vector<4x128xf32>
    %c1_21 = arith.constant 1 : index
    %c0_22 = arith.constant 0 : index
    %c0_23 = arith.constant 0 : index
    %83 = vector.load %arg0[%c1_21, %c0_22, %c0_23] : memref<5x4x128xf32, #tpu.memory_space<vmem>>, vector<1x4x128xf32>
    %84 = vector.shape_cast %83 : vector<1x4x128xf32> to vector<4x128xf32>
    %cst_24 = arith.constant 5.000000e-01 : f32
    %85 = vector.broadcast %cst_24 : f32 to vector<4x128xf32>
    %86 = arith.mulf %85, %84 : vector<4x128xf32>
    %87 = math.tanh %86 : vector<4x128xf32>
    %cst_25 = arith.constant 5.000000e-01 : f32
    %88 = vector.broadcast %cst_25 : f32 to vector<4x128xf32>
    %89 = arith.mulf %88, %87 : vector<4x128xf32>
    %cst_26 = arith.constant 5.000000e-01 : f32
    %90 = vector.broadcast %cst_26 : f32 to vector<4x128xf32>
    %91 = arith.addf %89, %90 : vector<4x128xf32>
    %c4_27 = arith.constant 4 : index
    %c0_28 = arith.constant 0 : index
    %c0_29 = arith.constant 0 : index
    %92 = vector.load %arg0[%c4_27, %c0_28, %c0_29] : memref<5x4x128xf32, #tpu.memory_space<vmem>>, vector<1x4x128xf32>
    %93 = vector.shape_cast %92 : vector<1x4x128xf32> to vector<4x128xf32>
    %cst_30 = arith.constant 5.000000e-01 : f32
    %94 = vector.broadcast %cst_30 : f32 to vector<4x128xf32>
    %95 = arith.mulf %94, %93 : vector<4x128xf32>
    %96 = math.tanh %95 : vector<4x128xf32>
    %cst_31 = arith.constant 5.000000e-01 : f32
    %97 = vector.broadcast %cst_31 : f32 to vector<4x128xf32>
    %98 = arith.mulf %97, %96 : vector<4x128xf32>
    %cst_32 = arith.constant 5.000000e-01 : f32
    %99 = vector.broadcast %cst_32 : f32 to vector<4x128xf32>
    %100 = arith.addf %98, %99 : vector<4x128xf32>
    %101 = arith.addf %82, %23 : vector<4x128xf32>
    %c0_33 = arith.constant 0 : index
    %c0_34 = arith.constant 0 : index
    %c0_35 = arith.constant 0 : index
    %102 = vector.load %arg2[%c0_33, %c0_34, %c0_35] : memref<4x4x128xf32, #tpu.memory_space<vmem>>, vector<1x4x128xf32>
    %103 = vector.shape_cast %102 : vector<1x4x128xf32> to vector<4x128xf32>
    %104 = vector.shape_cast %101 : vector<4x128xf32> to vector<1x4x128xf32>
    tpu.vector_store %arg2[%c0_33, %c0_34, %c0_35], %104 {strides = array<i32>} : memref<4x4x128xf32, #tpu.memory_space<vmem>>, vector<1x4x128xf32>,
    %105 = arith.addf %91, %20 : vector<4x128xf32>
    %c1_36 = arith.constant 1 : index
    %c0_37 = arith.constant 0 : index
    %c0_38 = arith.constant 0 : index
    %106 = vector.load %arg2[%c1_36, %c0_37, %c0_38] : memref<4x4x128xf32, #tpu.memory_space<vmem>>, vector<1x4x128xf32>
    %107 = vector.shape_cast %106 : vector<1x4x128xf32> to vector<4x128xf32>
    %108 = vector.shape_cast %105 : vector<4x128xf32> to vector<1x4x128xf32>
    tpu.vector_store %arg2[%c1_36, %c0_37, %c0_38], %108 {strides = array<i32>} : memref<4x4x128xf32, #tpu.memory_space<vmem>>, vector<1x4x128xf32>,
    %c2_39 = arith.constant 2 : index
    %c0_40 = arith.constant 0 : index
    %c0_41 = arith.constant 0 : index
    %109 = vector.load %arg0[%c2_39, %c0_40, %c0_41] : memref<5x4x128xf32, #tpu.memory_space<vmem>>, vector<1x4x128xf32>
    %110 = vector.shape_cast %109 : vector<1x4x128xf32> to vector<4x128xf32>
    %111 = math.exp %110 : vector<4x128xf32>
    %112 = arith.mulf %111, %70 : vector<4x128xf32>
    %c2_42 = arith.constant 2 : index
    %c0_43 = arith.constant 0 : index
    %c0_44 = arith.constant 0 : index
    %113 = vector.load %arg2[%c2_42, %c0_43, %c0_44] : memref<4x4x128xf32, #tpu.memory_space<vmem>>, vector<1x4x128xf32>
    %114 = vector.shape_cast %113 : vector<1x4x128xf32> to vector<4x128xf32>
    %115 = vector.shape_cast %112 : vector<4x128xf32> to vector<1x4x128xf32>
    tpu.vector_store %arg2[%c2_42, %c0_43, %c0_44], %115 {strides = array<i32>} : memref<4x4x128xf32, #tpu.memory_space<vmem>>, vector<1x4x128xf32>,
    %c3_45 = arith.constant 3 : index
    %c0_46 = arith.constant 0 : index
    %c0_47 = arith.constant 0 : index
    %116 = vector.load %arg0[%c3_45, %c0_46, %c0_47] : memref<5x4x128xf32, #tpu.memory_space<vmem>>, vector<1x4x128xf32>
    %117 = vector.shape_cast %116 : vector<1x4x128xf32> to vector<4x128xf32>
    %118 = math.exp %117 : vector<4x128xf32>
    %119 = arith.mulf %118, %73 : vector<4x128xf32>
    %c3_48 = arith.constant 3 : index
    %c0_49 = arith.constant 0 : index
    %c0_50 = arith.constant 0 : index
    %120 = vector.load %arg2[%c3_48, %c0_49, %c0_50] : memref<4x4x128xf32, #tpu.memory_space<vmem>>, vector<1x4x128xf32>
    %121 = vector.shape_cast %120 : vector<1x4x128xf32> to vector<4x128xf32>
    %122 = vector.shape_cast %119 : vector<4x128xf32> to vector<1x4x128xf32>
    tpu.vector_store %arg2[%c3_48, %c0_49, %c0_50], %122 {strides = array<i32>} : memref<4x4x128xf32, #tpu.memory_space<vmem>>, vector<1x4x128xf32>,
    %cst_51 = arith.constant 2.500000e-01 : f32
    %123 = vector.broadcast %cst_51 : f32 to vector<4x128xf32>
    %124 = arith.cmpf ogt, %100, %123 : vector<4x128xf32>
    %125 = arith.andi %6, %124 : vector<4x128xi1>
    %cst_52 = arith.constant 1.000000e+00 : f32
    %cst_53 = arith.constant 0.000000e+00 : f32
    %126 = vector.broadcast %cst_52 : f32 to vector<4x128xf32>
    %127 = vector.broadcast %cst_53 : f32 to vector<4x128xf32>
    %128 = arith.select %125, %126, %127 : vector<4x128xi1>, vector<4x128xf32>
    %129 = vector.shape_cast %128 : vector<4x128xf32> to vector<1x4x128xf32>
    %cst_54 = arith.constant dense<0.000000e+00> : vector<1xf32>
    %130 = vector.multi_reduction <add>, %129, %cst_54 [1, 2] : vector<1x4x128xf32> to vector<1xf32>
    %131 = vector.shape_cast %130 : vector<1xf32> to vector<1x1x1xf32>
    %132 = vector.extract %131[0, 0, 0] : f32 from vector<1x1x1xf32>
    %c0_55 = arith.constant 0 : index
    %133 = memref.load %arg3[%c0_55] : memref<1xf32, #tpu.memory_space<smem>>
    memref.store %132, %arg3[%c0_55] : memref<1xf32, #tpu.memory_space<smem>>
    return
  }
}

</mosaic_0001>

<llo_original>
// kernel: tpu_custom_call.1
$region0: #{tpu_custom_call.1}
  #allocation0 [shape = 'u32[]', space=smem, size = 0x4, offset = 0x4, fixed_abs, tag = 'smem constant byte address 0x4 - core index']
  #allocation1 [shape = 'u32[144,128]{1,0:T(1,128)}', space=vmem, size = 0x12000, scoped, tag = 'internal scratch']
  %s0 = inlined_call_operand.hbm [shape: f32[5,4,128], index: 0, kind: input, shape index: {}]
  %s1 = inlined_call_operand.vmem [shape: f32[10], index: 1, kind: input, shape index: {}]
  %s2 = inlined_call_operand.hbm [shape: f32[4,4,128], index: 2, kind: output, shape index: {0}]
  %s3 = inlined_call_operand.hbm [shape: f32[1], index: 3, kind: output, shape index: {1}]
  %4 = xla_tuple %s2, %s3
  %s5 = sld [smem:[#allocation0]]
  $region34: #{tpu_custom_call.1} parent=0
    _
  %s7 = ssub.s32 1, %s5
  %s8 = scalar_select 0, %s7, %s5
  $region1: #{tpu_custom_call.1} parent=0
    #allocation2 [shape = 'u8[10240]{0}', space=vmem, size = 0x2800, scoped, tag = 'input window, operand 0, single buffered']
    #allocation3 [shape = 's32[1]{0}', space=sflag, size = 0x4, scoped, tag = 'scoped memory for tpu_custom_call.1']
    #allocation4 [shape = 's32[1]{0}', space=sflag, size = 0x4, scoped, tag = 'scoped memory for tpu_custom_call.1']
    #allocation5 [shape = 's32[1]{0}', space=sflag, size = 0x4, scoped, tag = 'scoped memory for tpu_custom_call.1']
    #allocation6 [shape = 's32[1]{0}', space=sflag, size = 0x4, scoped, tag = 'scoped memory for tpu_custom_call.1']
    #allocation7 [shape = 'u8[512]{0}', space=smem, size = 0x200, scoped, tag = 'input window, operand 1, single buffered']
    #allocation8 [shape = 'u8[8192]{0}', space=vmem, size = 0x2000, scoped, tag = 'output window, operand 0, single buffered']
    #allocation9 [shape = 'u8[512]{0}', space=smem, size = 0x200, scoped, tag = 'output window, operand 1, single buffered']
    %9 = vsyncpa [#allocation3], 0
    %10 = vsyncpa [#allocation6], 0
    %11 = vsyncpa [#allocation4], 0
    %12 = vsyncpa [#allocation5], 0
    // Predicated region
    $region2: #{tpu_custom_call.1} parent=1 // pred_check
      _
    $region3: #{tpu_custom_call.1} parent=1 // pred_check_branch
      %14 = sbr.rel (0) target = $region5
    $region4: #{tpu_custom_call.1} parent=1 // pred_region
      %s16 = ssub.s32 320, 320
      %17 = vsyncadd [#allocation3], %s16
      %s18 = sshll.u32 [#allocation2], 4
      %s19 = int_to_ptr.vmem [resolvable:$true] %s18
      %24 = dma.hbm_to_vmem [thread:$0]  %s0, 320, %s19, [#allocation3], 64, 64, 4
    $region5: #{tpu_custom_call.1} parent=1 // pred_fallthru
      _
    // Predicated region
    $region6: #{tpu_custom_call.1} parent=1 // pred_check
      _
    $region7: #{tpu_custom_call.1} parent=1 // pred_check_branch
      %26 = sbr.rel (0) target = $region9
    $region8: #{tpu_custom_call.1} parent=1 // pred_region
      %s28 = ssub.s32 16, 16
      %29 = vsyncadd [#allocation6], %s28
      %s31 = sshll.u32 %s1, 4
      %s32 = int_to_ptr.vmem [resolvable:$true] %s31
      %34 = dma.vmem_to_smem %s32, 16, [#allocation7], [#allocation6]
    $region9: #{tpu_custom_call.1} parent=1 // pred_fallthru
      _
    // Predicated region
    $region10: #{tpu_custom_call.1} parent=1 // pred_check
      _
    $region11: #{tpu_custom_call.1} parent=1 // pred_check_branch
      %36 = sbr.rel (0) target = $region13
    $region12: #{tpu_custom_call.1} parent=1 // pred_region
      %37 = dma.done [#allocation3], 320
    $region13: #{tpu_custom_call.1} parent=1 // pred_fallthru
      _
    // Predicated region
    $region14: #{tpu_custom_call.1} parent=1 // pred_check
      _
    $region15: #{tpu_custom_call.1} parent=1 // pred_check_branch
      %39 = sbr.rel (0) target = $region17
    $region16: #{tpu_custom_call.1} parent=1 // pred_region
      %40 = dma.done [#allocation6], 16
    $region17: #{tpu_custom_call.1} parent=1 // pred_fallthru
      _
    %41 = sfence
    %v42 = vlaneseq
    %v43 = vshrl.u32 %v42, 7
    %v44 = vlaneseq
    %v45 = vand.u32 %v44, 127
    %v46 = vmul.u32 %v43, 128
    %v47 = vadd.s32 %v46, %v45
    %vm48 = vcmp.lt.s32.totalorder %v47, 490
    %v49 = vcvt.s32.f32 %v47
    %v50 = vadd.f32 %v49, 0.5
    %v51 = vrcp.pop 49.0
    %v52 = vmul.f32 %v50, %v51
    %v53 = vfloor.f32 %v52
    %v54 = vmul.f32 %v53, 49.0
    %v55 = vsub.f32 %v49, %v54
    %v56 = vadd.f32 %v55, 0.5
    %v57 = vrcp.pop 7.0
    %v58 = vmul.f32 %v56, %v57
    %v59 = vfloor.f32 %v58
    %v60 = vmul.f32 %v59, 7.0
    %v61 = vsub.f32 %v55, %v60
    %v62 = vadd.f32 %v53, 0.5
    %v63 = vrcp.pop 5.0
    %v64 = vmul.f32 %v62, %v63
    %v65 = vfloor.f32 %v64
    %v66 = vmul.f32 %v65, 5.0
    %v67 = vsub.f32 %v53, %v66
    %vm68 = vcmp.eq.f32.partialorder %v67, 0.0
    %s69 = sld [smem:[#allocation7]]
    %v70 = vstv %s69
    %v71 = vsel %vm68, %v70, 0.0
    %s72 = sld [smem:[#allocation7 + $0x1]]
    %v73 = vstv %s72
    %v74 = vsel %vm68, %v73, 0.0
    %vm75 = vcmp.eq.f32.partialorder %v67, 1.0
    %s76 = sld [smem:[#allocation7 + $0x2]]
    %v77 = vstv %s76
    %v78 = vsel %vm75, %v77, %v71
    %s79 = sld [smem:[#allocation7 + $0x3]]
    %v80 = vstv %s79
    %v81 = vsel %vm75, %v80, %v74
    %vm82 = vcmp.eq.f32.partialorder %v67, 2.0
    %s83 = sld [smem:[#allocation7 + $0x4]]
    %v84 = vstv %s83
    %v85 = vsel %vm82, %v84, %v78
    %s86 = sld [smem:[#allocation7 + $0x5]]
    %v87 = vstv %s86
    %v88 = vsel %vm82, %v87, %v81
    %vm89 = vcmp.eq.f32.partialorder %v67, 3.0
    %s90 = sld [smem:[#allocation7 + $0x6]]
    %v91 = vstv %s90
    %v92 = vsel %vm89, %v91, %v85
    %s93 = sld [smem:[#allocation7 + $0x7]]
    %v94 = vstv %s93
    %v95 = vsel %vm89, %v94, %v88
    %vm96 = vcmp.eq.f32.partialorder %v67, 4.0
    %s97 = sld [smem:[#allocation7 + $0x8]]
    %v98 = vstv %s97
    %v99 = vsel %vm96, %v98, %v92
    %s100 = sld [smem:[#allocation7 + $0x9]]
    %v101 = vstv %s100
    %v102 = vsel %vm96, %v101, %v95
    %v103 = vld [vmem:[#allocation2] sm:$0xf]
    %v104 = vmul.f32 %v103, 0.5
    %v105 = vtanh.pop %v104
    %v106 = vmul.f32 %v105, 0.5
    %v107 = vadd.f32 %v106, 0.5
    %s108 = scalar_lea.vmem [#allocation2], 4
    %v109 = vld [vmem:[%s108] sm:$0xf]
    %v110 = vmul.f32 %v109, 0.5
    %v111 = vtanh.pop %v110
    %v112 = vmul.f32 %v111, 0.5
    %v113 = vadd.f32 %v112, 0.5
    %s114 = scalar_lea.vmem [#allocation2], 16
    %v115 = vld [vmem:[%s114] sm:$0xf]
    %v116 = vmul.f32 %v115, 0.5
    %v117 = vtanh.pop %v116
    %v118 = vmul.f32 %v117, 0.5
    %v119 = vadd.f32 %v118, 0.5
    %v120 = vadd.f32 %v107, %v61
    %121 = vst [vmem:[#allocation8] sm:$0xf] %v120
    %v122 = vadd.f32 %v113, %v59
    %s123 = scalar_lea.vmem [#allocation8], 4
    %124 = vst [vmem:[%s123] sm:$0xf] %v122
    %s125 = scalar_lea.vmem [#allocation2], 8
    %v126 = vld [vmem:[%s125] sm:$0xf]
    %v127 = vmul.f32 %v126, 1.442695
    %v128 = vpow.pop %v127
    %v129 = vmul.f32 %v128, %v99
    %s130 = scalar_lea.vmem [#allocation8], 8
    %131 = vst [vmem:[%s130] sm:$0xf] %v129
    %s132 = scalar_lea.vmem [#allocation2], 12
    %v133 = vld [vmem:[%s132] sm:$0xf]
    %v134 = vmul.f32 %v133, 1.442695
    %v135 = vpow.pop %v134
    %v136 = vmul.f32 %v135, %v102
    %s137 = scalar_lea.vmem [#allocation8], 12
    %138 = vst [vmem:[%s137] sm:$0xf] %v136
    %vm139 = vcmp.gt.f32.partialorder %v119, 0.25
    %vm140 = vmand %vm48, %vm139
    %v141 = vsel %vm140, 1.0, 0.0
    %vm142 = vcmask 1043456
    %v143 = vsel %vm142, %v141, 0.0
    %144 = vadd.xlane.f32.xlu0 %v143
    %v145 = vpop.xlane.xlu0 %144
    %v146 = vrot.slane %v145, 4
    %v147 = vadd.f32 %v145, %v146
    %v148 = vrot.slane %v147, 2
    %v149 = vadd.f32 %v147, %v148
    %v150 = vrot.slane %v149, 1
    %v151 = vadd.f32 %v149, %v150
    %s152 = vtos %v151
    %s153 = scalar_lea.smem [#allocation9], 0
    %154 = sst [smem:[%s153]] %s152
    // Predicated region
    $region18: #{tpu_custom_call.1} parent=1 // pred_check
      _
    $region19: #{tpu_custom_call.1} parent=1 // pred_check_branch
      %156 = sbr.rel (0) target = $region21
    $region20: #{tpu_custom_call.1} parent=1 // pred_region
      %s158 = ssub.s32 256, 256
      %159 = vsyncadd [#allocation4], %s158
      %s160 = sshll.u32 [#allocation8], 4
      %s161 = int_to_ptr.vmem [resolvable:$true] %s160
      %166 = dma.vmem_to_hbm [thread:$0]  %s161, 256, %s2, [#allocation4], 64, 64, 4
    $region21: #{tpu_custom_call.1} parent=1 // pred_fallthru
      _
    // Predicated region
    $region22: #{tpu_custom_call.1} parent=1 // pred_check
      _
    $region23: #{tpu_custom_call.1} parent=1 // pred_check_branch
      %168 = sbr.rel (0) target = $region25
    $region24: #{tpu_custom_call.1} parent=1 // pred_region
      %s170 = ssub.s32 16, 16
      %171 = vsyncadd [#allocation5], %s170
      %174 = dma.smem_to_hbm [#allocation9], 16, %s3, [#allocation5]
    $region25: #{tpu_custom_call.1} parent=1 // pred_fallthru
      _
    // Predicated region
    $region26: #{tpu_custom_call.1} parent=1 // pred_check
      _
    $region27: #{tpu_custom_call.1} parent=1 // pred_check_branch
      %176 = sbr.rel (0) target = $region29
    $region28: #{tpu_custom_call.1} parent=1 // pred_region
      %177 = dma.done [#allocation4], 256
    $region29: #{tpu_custom_call.1} parent=1 // pred_fallthru
      _
    // Predicated region
    $region30: #{tpu_custom_call.1} parent=1 // pred_check
      _
    $region31: #{tpu_custom_call.1} parent=1 // pred_check_branch
      %179 = sbr.rel (0) target = $region33
    $region32: #{tpu_custom_call.1} parent=1 // pred_region
      %180 = dma.done [#allocation5], 16
    $region33: #{tpu_custom_call.1} parent=1 // pred_fallthru
      _
    %181 = sfence
    %182 = vsyncpa [#allocation3], 1
    %183 = vsyncpa [#allocation4], 1
    %184 = vsyncpa [#allocation5], 1
    %185 = vsyncpa [#allocation6], 1

</llo_original>
